<compile_context>
chip_gen: v5e
topology: v5e:2x2
jax: 0.10.0
libtpu: 0.0.40
codegen_flags: <defaults>
</compile_context>

<pallas_src>
import functools

import jax
import jax.numpy as jnp
from jax.experimental import pallas as pl
from jax.experimental.pallas import tpu as pltpu

EPS = 1e-10


def _round_up(x, m):
    return ((x + m - 1) // m) * m


def _round_down(x, m):
    return (x // m) * m


def _vmem_working_set_budget_bytes():
    """Budget for the 2x(in) + 2x(out) double-buffered f32 blocks."""
    try:
        cap = pltpu.get_tpu_info().vmem_capacity_bytes
    except Exception:
        cap = 64 << 20  # most conservative physical size (v7x per-TC)
    # ~1/4 of physical VMEM for the pipelined working set, capped so the
    # requested scoped limit (working set + weight block + compiler scratch)
    # stays comfortably under 32 MiB on every generation.
    return int(min(cap // 4, 24 << 20))


def _pick_hw_tile(C, HW):
    """Lane-dense HW tile sized by target block bytes, not a fixed lane count."""
    target_block_bytes = max(1 << 20, _vmem_working_set_budget_bytes() // 4)
    tile = _round_down(max(target_block_bytes // (4 * max(C, 1)), 128), 128)
    # Never allocate a VMEM block wider than the (128-rounded) spatial extent.
    tile = min(tile, _round_up(HW, 128))
    return max(128, tile)


def _l2norm_kernel(x_ref, w_ref, o_ref):
    # x_ref/o_ref: (C, T) with the batch dim squeezed away; w_ref: (C, 1).
    x = x_ref[...].astype(jnp.float32)
    # Channel (sublane-axis) reduction -> (1, T); norms are per spatial column,
    # so garbage lanes in a ragged last block cannot affect valid columns.
    sumsq = jnp.sum(x * x, axis=0, keepdims=True)
    norm = jnp.sqrt(sumsq) + EPS                     # exact PyTorch semantics
    inv = pl.reciprocal(norm, approx=False)          # one recip per column, exact
    w = w_ref[...].astype(jnp.float32)               # (C, 1) broadcasts vs (C, T)
    o_ref[...] = ((x * inv) * w).astype(o_ref.dtype)


@functools.partial(jax.jit, static_argnames=("hw_tile",))
def l2norm(x_nchw, weight, *, hw_tile=None):
    """x_nchw: (N, C, H, W); weight: (C,).  Returns (N, C, H, W)."""
    N, C, H, W = x_nchw.shape
    HW = H * W
    tile = hw_tile if hw_tile is not None else _pick_hw_tile(C, HW)

    # Pure metadata reshape (last two dims are contiguous): no HBM pass.
    x3 = x_nchw.reshape(N, C, HW)
    w2 = weight.reshape(C, 1)

    n_hw_tiles = pl.cdiv(HW, tile)  # ragged last block handled by masked stores

    out3 = pl.pallas_call(
        _l2norm_kernel,
        out_shape=jax.ShapeDtypeStruct((N, C, HW), x_nchw.dtype),
        grid_spec=pltpu.PrefetchScalarGridSpec(
            num_scalar_prefetch=0,
            grid=(N, n_hw_tiles),
            in_specs=[
                # Batch dim squeezed: kernel sees (C, tile).
                pl.BlockSpec((None, C, tile), lambda n, s: (n, 0, s)),
                # Tiny constant weight block, revisited every step.
                pl.BlockSpec((C, 1), lambda n, s: (0, 0)),
            ],
            out_specs=pl.BlockSpec((None, C, tile), lambda n, s: (n, 0, s)),
        ),
        compiler_params=pltpu.CompilerParams(
            dimension_semantics=("parallel", "parallel"),
            vmem_limit_bytes=32 << 20,
        ),
    )(x3, w2)

    return out3.reshape(N, C, H, W)


def l2norm_ref(x, weight):
    norm = jnp.sqrt(jnp.sum(x * x, axis=1, keepdims=True)) + EPS
    return (x / norm) * weight.reshape(1, -1, 1, 1)


if __name__ == "__main__":
    key = jax.random.PRNGKey(0)
    scale = 20.0  # gamma; weight is constant-initialized to `scale`

    # Case 1: small, 128-multiple spatial extent.
    N, C, H, W = 2, 4, 16, 16
    k1, k2, k3 = jax.random.split(key, 3)
    x = jax.random.normal(k1, (N, C, H, W), dtype=jnp.float32)
    weight = jnp.full((C,), scale, dtype=jnp.float32)

    out = jax.block_until_ready(l2norm(x, weight))
    ref = l2norm_ref(x, weight)
    assert out.shape == (N, C, H, W)
    assert jnp.allclose(out, ref, atol=1e-5, rtol=1e-5), "mismatch vs reference (case 1)"

    # Case 2: ragged spatial extent (SSD-like 19x19) -> single partial block.
    N2, C2, H2, W2 = 1, 8, 19, 19
    x2 = jax.random.normal(k2, (N2, C2, H2, W2), dtype=jnp.float32)
    weight2 = jnp.full((C2,), scale, dtype=jnp.float32)

    out2 = jax.block_until_ready(l2norm(x2, weight2))
    ref2 = l2norm_ref(x2, weight2)
    assert out2.shape == (N2, C2, H2, W2)
    assert jnp.allclose(out2, ref2, atol=1e-5, rtol=1e-5), "mismatch vs reference (case 2)"

    # Case 3: force a small tile so the grid has several HW steps with a ragged
    # last block (exercises the masked-store tail path across a real pipeline).
    out3 = jax.block_until_ready(l2norm(x2, weight2, hw_tile=128))
    assert jnp.allclose(out3, ref2, atol=1e-5, rtol=1e-5), "mismatch vs reference (case 3)"

    print("KERNEL_OK")
</pallas_src>

<mosaic_0001>
module attributes {stable_mosaic.version = 11 : i64} {
  func.func @_l2norm_kernel(%arg0: i32, %arg1: i32, %arg2: memref<1x4x256xf32, #tpu.memory_space<vmem>>, %arg3: memref<4x1xf32, #tpu.memory_space<vmem>>, %arg4: memref<1x4x256xf32, #tpu.memory_space<vmem>>) attributes {dimension_semantics = [#tpu.dimension_semantics<parallel>, #tpu.dimension_semantics<parallel>], iteration_bounds = array<i64: 2, 1>, scalar_prefetch = 0 : i64, scratch_operands = 0 : i64, tpu.core_type = #tpu.core_type<tc>, window_params = [{transform_indices = @transform_0, window_bounds = array<i64: 1, 4, 256>}, {pipeline_mode = #tpu.pipeline_mode<synchronous>, transform_indices = @transform_1, window_bounds = array<i64: 4, 1>}, {transform_indices = @transform_2, window_bounds = array<i64: 1, 4, 256>}]} {
    %c0 = arith.constant 0 : index
    %c0_0 = arith.constant 0 : index
    %c0_1 = arith.constant 0 : index
    %0 = vector.load %arg2[%c0, %c0_0, %c0_1] : memref<1x4x256xf32, #tpu.memory_space<vmem>>, vector<1x4x256xf32>
    %1 = vector.shape_cast %0 : vector<1x4x256xf32> to vector<4x256xf32>
    %2 = arith.mulf %1, %1 : vector<4x256xf32>
    %cst = arith.constant dense<0.000000e+00> : vector<256xf32>
    %3 = vector.multi_reduction <add>, %2, %cst [0] : vector<4x256xf32> to vector<256xf32>
    %4 = vector.shape_cast %3 : vector<256xf32> to vector<1x256xf32>
    %5 = math.sqrt %4 : vector<1x256xf32>
    %cst_2 = arith.constant 1.000000e-10 : f32
    %6 = vector.broadcast %cst_2 : f32 to vector<1x256xf32>
    %7 = arith.addf %5, %6 : vector<1x256xf32>
    %8 = tpu.reciprocal %7 : vector<1x256xf32> -> vector<1x256xf32>
    %c0_3 = arith.constant 0 : index
    %c0_4 = arith.constant 0 : index
    %9 = vector.load %arg3[%c0_3, %c0_4] : memref<4x1xf32, #tpu.memory_space<vmem>>, vector<4x1xf32>
    %10 = vector.broadcast %8 : vector<1x256xf32> to vector<4x256xf32>
    %11 = arith.mulf %1, %10 : vector<4x256xf32>
    %12 = vector.broadcast %9 : vector<4x1xf32> to vector<4x256xf32>
    %13 = arith.mulf %11, %12 : vector<4x256xf32>
    %c0_5 = arith.constant 0 : index
    %c0_6 = arith.constant 0 : index
    %c0_7 = arith.constant 0 : index
    %14 = vector.load %arg4[%c0_5, %c0_6, %c0_7] : memref<1x4x256xf32, #tpu.memory_space<vmem>>, vector<1x4x256xf32>
    %15 = vector.shape_cast %14 : vector<1x4x256xf32> to vector<4x256xf32>
    %16 = vector.shape_cast %13 : vector<4x256xf32> to vector<1x4x256xf32>
    tpu.vector_store %arg4[%c0_5, %c0_6, %c0_7], %16 {strides = array<i32>} : memref<1x4x256xf32, #tpu.memory_space<vmem>>, vector<1x4x256xf32>,
    return
  }
  func.func @transform_0(%arg0: i32, %arg1: i32) -> (i32, i32, i32) {
    %c0_i32 = arith.constant 0 : i32
    %c0_i32_0 = arith.constant 0 : i32
    return %arg0, %c0_i32, %arg1 : i32, i32, i32
  }
  func.func @transform_1(%arg0: i32, %arg1: i32) -> (i32, i32) {
    %c0_i32 = arith.constant 0 : i32
    %c0_i32_0 = arith.constant 0 : i32
    %c0_i32_1 = arith.constant 0 : i32
    return %c0_i32, %c0_i32_0 : i32, i32
  }
  func.func @transform_2(%arg0: i32, %arg1: i32) -> (i32, i32, i32) {
    %c0_i32 = arith.constant 0 : i32
    %c0_i32_0 = arith.constant 0 : i32
    return %arg0, %c0_i32, %arg1 : i32, i32, i32
  }
}

</mosaic_0001>

<llo_original>
// kernel: l2norm.1
$region0: #{l2norm.1}
  #allocation0 [shape = 'u32[]', space=smem, size = 0x4, offset = 0x4, fixed_abs, tag = 'smem constant byte address 0x4 - core index']
  #allocation1 [shape = 'u32[72,128]{1,0:T(1,128)}', space=vmem, size = 0x9000, scoped, tag = 'internal scratch']
  %s0 = inlined_call_operand.vmem [shape: f32[2,4,256], index: 0, kind: input, shape index: {}]
  %s1 = inlined_call_operand.vmem [shape: f32[4,1], index: 1, kind: input, shape index: {}]
  %s2 = inlined_call_operand.vmem [shape: f32[2,4,256], index: 2, kind: output, shape index: {}]
  %s3 = sld [smem:[#allocation0]]
  $region41: #{l2norm.1} parent=0
    _
  %s5 = ssub.s32 1, %s3
  %s6 = scalar_select 0, %s5, %s3
  loop: start=0, step=1, limit=4
  $region2: #{l2norm.1} parent=0 // loop_pre_header
    _
  $region3: #{l2norm.1} parent=0 // loop_header
    %s8 = sphi 0, %s12
    %p9 = scmp.ge.s32.totalorder %s8, 4
    %s15 = sphi 0, %s27
    %s16 = sphi 0, %s23
    %s17 = sphi 0, %s15
    %s18 = sphi 0, %s16
    %s19 = sphi 0, %s17
    %s20 = sphi 0, %s18
    %s32 = sphi 0, %s34
    %s35 = sphi 0, %s32
    %s36 = sphi 0, %s35
    %s52 = sphi 0, %s36
    %s56 = sphi 0, %s56
    %s58 = sphi 0, %s56
    %s59 = sphi 0, %s58
    %s73 = sphi 0, %s59
    %s81 = sphi 0, %s83
    %s84 = sphi 0, %s81
    %s85 = sphi 0, %s84
    %s101 = sphi 0, %s85
  $region4: #{l2norm.1} parent=0 // loop_header_branch
    %11 = sbr.rel (%p9) target = $region8
  $region5: #{l2norm.1} parent=0 // loop_body
    %s13 = ssub.s32 %s8, 1
    %s14 = ssub.s32 %s8, 2
    %s21 = sadd.s32 1, %s16
    %p22 = scmp.ge.s32.totalorder %s21, 1
    %s23 = scalar_select %p22, 0, %s21
    %s24 = sadd.s32 1, %s15
    %s25 = scalar_select %p22, %s24, %s15
    %p26 = scmp.ge.s32.totalorder %s25, 2
    %s27 = scalar_select %p26, 0, %s25
    %s28 = ssub.s32 %s15, %s27
    %s29 = ssub.s32 %s16, %s23
    %s30 = sor.u32 %s28, %s29
    %p31 = scmp.eq.s32.totalorder %s30, 0
    %s33 = sadd.s32 %s32, 1
    %s34 = scalar_select %p31, %s32, %s33
    %p37 = pneg %p31
    %p38 = scmp.eq.s32.totalorder %s8, 1
    %p39 = por %p37, %p38
    %p40 = scmp.ne.s32.totalorder %s32, %s35
    %p41 = scmp.eq.s32.totalorder %s8, 0
    %p42 = por %p40, %p41
    %p43 = scmp.ne.s32.totalorder %s32, %s35
    %p44 = scmp.eq.s32.totalorder %s13, 1
    %p45 = por %p43, %p44
    %p46 = scmp.ne.s32.totalorder %s35, %s36
    %p47 = scmp.eq.s32.totalorder %s13, 0
    %p48 = por %p46, %p47
    %p49 = scmp.ne.s32.totalorder %s35, %s36
    %p50 = scmp.eq.s32.totalorder %s14, 1
    %p51 = por %p49, %p50
    %p53 = scmp.ne.s32.totalorder %s36, %s52
    %p54 = scmp.eq.s32.totalorder %s14, 0
    %p55 = por %p53, %p54
    %s57 = sadd.s32 %s56, 1
    %p60 = scmp.eq.s32.totalorder %s8, 1
    %p61 = scmp.ne.s32.totalorder %s56, %s58
    %p62 = scmp.eq.s32.totalorder %s8, 0
    %p63 = por %p61, %p62
    %p64 = scmp.ne.s32.totalorder %s56, %s58
    %p65 = scmp.eq.s32.totalorder %s13, 1
    %p66 = por %p64, %p65
    %p67 = scmp.ne.s32.totalorder %s58, %s59
    %p68 = scmp.eq.s32.totalorder %s13, 0
    %p69 = por %p67, %p68
    %p70 = scmp.ne.s32.totalorder %s58, %s59
    %p71 = scmp.eq.s32.totalorder %s14, 1
    %p72 = por %p70, %p71
    %p74 = scmp.ne.s32.totalorder %s59, %s73
    %p75 = scmp.eq.s32.totalorder %s14, 0
    %p76 = por %p74, %p75
    %s77 = ssub.s32 %s15, %s27
    %s78 = ssub.s32 %s16, %s23
    %s79 = sor.u32 %s77, %s78
    %p80 = scmp.eq.s32.totalorder %s79, 0
    %s82 = sadd.s32 %s81, 1
    %s83 = scalar_select %p80, %s81, %s82
    %p86 = pneg %p80
    %p87 = scmp.eq.s32.totalorder %s8, 1
    %p88 = por %p86, %p87
    %p89 = scmp.ne.s32.totalorder %s81, %s84
    %p90 = scmp.eq.s32.totalorder %s8, 0
    %p91 = por %p89, %p90
    %p92 = scmp.ne.s32.totalorder %s81, %s84
    %p93 = scmp.eq.s32.totalorder %s13, 1
    %p94 = por %p92, %p93
    %p95 = scmp.ne.s32.totalorder %s84, %s85
    %p96 = scmp.eq.s32.totalorder %s13, 0
    %p97 = por %p95, %p96
    %p98 = scmp.ne.s32.totalorder %s84, %s85
    %p99 = scmp.eq.s32.totalorder %s14, 1
    %p100 = por %p98, %p99
    %p102 = scmp.ne.s32.totalorder %s85, %s101
    %p103 = scmp.eq.s32.totalorder %s14, 0
    %p104 = por %p102, %p103
    %p105 = scmp.le.s32.totalorder 1, %s8
    %p106 = scmp.lt.s32.totalorder %s8, 3
    %p107 = pnand %p105, %p106
    %p108 = pneg %p107
    // Predicated region
    $region9: #{l2norm.1} parent=5 // pred_check
      _
    $region10: #{l2norm.1} parent=5 // pred_check_branch
      %110 = sbr.rel (%p107) target = $region12
    $region11: #{l2norm.1} parent=5 // pred_region
      %s111 = ssub.s32 %s8, 1
      // Predicated region
      $region13: #{l2norm.1} parent=11 // pred_check
        %p112 = pneg %p69
      $region14: #{l2norm.1} parent=11 // pred_check_branch
        %114 = sbr.rel (%p112) target = $region16
      $region15: #{l2norm.1} parent=11 // pred_region
        _
      $region16: #{l2norm.1} parent=11 // pred_fallthru
        _
    $region12: #{l2norm.1} parent=5 // pred_fallthru
      _
    %p115 = scmp.lt.s32.totalorder %s8, 2
    // Predicated region
    $region17: #{l2norm.1} parent=5 // pred_check
      %p116 = pneg %p115
    $region18: #{l2norm.1} parent=5 // pred_check_branch
      %118 = sbr.rel (%p116) target = $region20
    $region19: #{l2norm.1} parent=5 // pred_region
      // Predicated region
      $region21: #{l2norm.1} parent=19 // pred_check
        %p119 = pneg %p42
      $region22: #{l2norm.1} parent=19 // pred_check_branch
        %121 = sbr.rel (%p119) target = $region24
      $region23: #{l2norm.1} parent=19 // pred_region
        %s122 = smul.u32 2, %s16
        %p123 = scmp.lt.s32.totalorder %s15, 1
        %s124 = scalar_select %p123, %s15, 1
        %p125 = scmp.lt.s32.totalorder %s122, 1
        %s126 = scalar_select %p125, %s122, 1
        %s127 = smul.addr %s124, 2
        %s128 = sadd.s32 %s126, %s127
        %s129 = smul.addr %s128, 4
        %s130 = scalar_lea.vmem %s0, %s129
        %s131 = smul.u32 2, %s16
      $region24: #{l2norm.1} parent=19 // pred_fallthru
        _
    $region20: #{l2norm.1} parent=5 // pred_fallthru
      _
    %p132 = scmp.le.s32.totalorder 1, %s8
    %p133 = scmp.lt.s32.totalorder %s8, 3
    %p134 = pnand %p132, %p133
    %p135 = pneg %p134
    // Predicated region
    $region25: #{l2norm.1} parent=5 // pred_check
      _
    $region26: #{l2norm.1} parent=5 // pred_check_branch
      %137 = sbr.rel (%p134) target = $region28
    $region27: #{l2norm.1} parent=5 // pred_region
      %s138 = ssub.s32 %s8, 1
      %s139 = smul.u32 2, %s18
      %p140 = scmp.lt.s32.totalorder %s17, 1
      %s141 = scalar_select %p140, %s17, 1
      %p142 = scmp.lt.s32.totalorder %s139, 1
      %s143 = scalar_select %p142, %s139, 1
      %s144 = smul.addr %s141, 2
      %s145 = sadd.s32 %s143, %s144
      %s146 = smul.addr %s145, 4
      %s147 = scalar_lea.vmem %s0, %s146
      %p148 = pneg %p48
      %p149 = pneg %p45
      %p150 = pneg %p69
      %p151 = pneg %p66
      %p152 = pneg %p97
      %p153 = pneg %p94
      %s154 = smul.u32 2, %s18
      %p155 = scmp.lt.s32.totalorder %s17, 1
      %s156 = scalar_select %p155, %s17, 1
      %p157 = scmp.lt.s32.totalorder %s154, 1
      %s158 = scalar_select %p157, %s154, 1
      %s159 = smul.addr %s156, 2
      %s160 = sadd.s32 %s158, %s159
      %s161 = smul.addr %s160, 4
      %s162 = scalar_lea.vmem %s2, %s161
      %s163 = smul.u32 2, %s18
      %p164 = scmp.lt.s32.totalorder %s17, 1
      %s165 = scalar_select %p164, %s17, 1
      %p166 = scmp.lt.s32.totalorder %s163, 1
      %s167 = scalar_select %p166, %s163, 1
      %s168 = smul.addr %s165, 2
      %s169 = sadd.s32 %s167, %s168
      %s170 = smul.addr %s169, 4
      %s171 = scalar_lea.vmem %s0, %s170
      %s172 = smul.u32 2, %s18
      %s173 = smul.u32 2, %s18
      %p174 = scmp.lt.s32.totalorder %s17, 1
      %s175 = scalar_select %p174, %s17, 1
      %p176 = scmp.lt.s32.totalorder %s173, 1
      %s177 = scalar_select %p176, %s173, 1
      %s178 = smul.addr %s175, 2
      %s179 = sadd.s32 %s177, %s178
      %s180 = smul.addr %s179, 4
      %s181 = scalar_lea.vmem %s2, %s180
      %s182 = smul.u32 2, %s18
      %v183 = vld [vmem:[%s171] sm:$0xff]
      %v184 = vmul.f32 %v183, %v183
      %186 = vst [vmem:[#allocation1] ss:$2 sm:$0xff] %v184
      %v187 = vld.sshfl [vmem:[#allocation1] sm:$0xff pattern:$0x75316420]
      %v188 = vld.sshfl [vmem:[#allocation1 + $0x8] sm:$0xff pattern:$0x75316420]
      %vm191 = vcmask 1043456
      %v192 = vsel %vm191, %v187, 0.0
      %v193 = vrot.slane %v192, 4
      %v194 = vadd.f32 %v192, %v193
      %v195 = vrot.slane %v194, 2
      %v196 = vadd.f32 %v194, %v195
      %v197 = vrot.slane %v196, 1
      %v198 = vadd.f32 %v196, %v197
      %v199 = vsel %vm191, %v188, 0.0
      %v200 = vrot.slane %v199, 4
      %v201 = vadd.f32 %v199, %v200
      %v202 = vrot.slane %v201, 2
      %v203 = vadd.f32 %v201, %v202
      %v204 = vrot.slane %v203, 1
      %v205 = vadd.f32 %v203, %v204
      %v206 = vrsqrt.pop %v198
      %v207 = vmul.f32 %v206, %v198
      %v208 = vmul.f32 %v207, %v206
      %v209 = vmul.f32 0.5, %v208
      %v210 = vsub.f32 1.5, %v209
      %v211 = vmul.f32 %v206, %v210
      %v212 = vmul.f32 %v198, %v211
      %vm213 = vcmp.eq.f32.partialorder %v198, inf
      %v214 = vsel %vm213, %v198, %v212
      %vm215 = vcmp.eq.f32.partialorder %v198, 0.0
      %v216 = vand.u32 %v198, 2147483648
      %v217 = vsel %vm215, %v216, %v214
      %v218 = vrsqrt.pop %v205
      %v219 = vmul.f32 %v218, %v205
      %v220 = vmul.f32 %v219, %v218
      %v221 = vmul.f32 0.5, %v220
      %v222 = vsub.f32 1.5, %v221
      %v223 = vmul.f32 %v218, %v222
      %v224 = vmul.f32 %v205, %v223
      %vm225 = vcmp.eq.f32.partialorder %v205, inf
      %v226 = vsel %vm225, %v205, %v224
      %vm227 = vcmp.eq.f32.partialorder %v205, 0.0
      %v228 = vand.u32 %v205, 2147483648
      %v229 = vsel %vm227, %v228, %v226
      %v230 = vadd.f32 %v217, 1e-10
      %v231 = vadd.f32 %v229, 1e-10
      %v232 = vrcp.pop %v230
      %v233 = vmul.f32 %v230, %v232
      %v234 = vsub.f32 1.0, %v233
      %v235 = vmul.f32 %v232, %v234
      %v236 = vadd.f32 %v232, %v235
      %vm237 = vweird.f32 %v230
      %vm238 = vweird.f32 %v232
      %vm239 = vmor %vm237, %vm238
      %v240 = vsel %vm239, %v232, %v236
      %v241 = vand.u32 2147483647, %v230
      %vm242 = vcmp.eq.f32.partialorder %v241, 8.507059e+37
      %v243 = vand.u32 %v230, 2147483648
      %v244 = vor.u32 1.1754944e-38, %v243
      %v245 = vsel %vm242, %v244, %v240
      %v246 = vrcp.pop %v231
      %v247 = vmul.f32 %v231, %v246
      %v248 = vsub.f32 1.0, %v247
      %v249 = vmul.f32 %v246, %v248
      %v250 = vadd.f32 %v246, %v249
      %vm251 = vweird.f32 %v231
      %vm252 = vweird.f32 %v246
      %vm253 = vmor %vm251, %vm252
      %v254 = vsel %vm253, %v246, %v250
      %v255 = vand.u32 2147483647, %v231
      %vm256 = vcmp.eq.f32.partialorder %v255, 8.507059e+37
      %v257 = vand.u32 %v231, 2147483648
      %v258 = vor.u32 1.1754944e-38, %v257
      %v259 = vsel %vm256, %v258, %v254
      %v260 = vld [vmem:[%s1] sm:$0xf]
      %v263 = vrot.slane %v259, 4
      %v264 = vsel %vm191, %v245, %v263
      %v266 = vmul.f32 %v183, %v264
      %268 = vset.pattern.permute.xlu0 0
      %269 = vperm.xlu0 %268, %v260
      %v270 = vpop.permute.xlu0 %269
      %v272 = vunpack.c.l.s4 839922192
      %v273 = vunpack.c.0.s8 %v272
      %v274 = vperm.slane %v270, %v273
      %v276 = vmul.f32 %v266, %v274
      %277 = vst [vmem:[%s181] sm:$0xff] %v276
      %s278 = smul.u32 2, %s18
      %p279 = scmp.lt.s32.totalorder %s17, 1
      %s280 = scalar_select %p279, %s17, 1
      %p281 = scmp.lt.s32.totalorder %s278, 1
      %s282 = scalar_select %p281, %s278, 1
      %s283 = smul.addr %s280, 2
      %s284 = sadd.s32 %s282, %s283
      %s285 = smul.addr %s284, 4
      %s286 = scalar_lea.vmem %s2, %s285
      // Predicated region
      $region29: #{l2norm.1} parent=27 // pred_check
        %p287 = pneg %p94
      $region30: #{l2norm.1} parent=27 // pred_check_branch
        %289 = sbr.rel (%p287) target = $region32
      $region31: #{l2norm.1} parent=27 // pred_region
        %s290 = smul.u32 2, %s18
      $region32: #{l2norm.1} parent=27 // pred_fallthru
        _
    $region28: #{l2norm.1} parent=5 // pred_fallthru
      _
    %p291 = scmp.le.s32.totalorder 2, %s8
    // Predicated region
    $region33: #{l2norm.1} parent=5 // pred_check
      %p292 = pneg %p291
    $region34: #{l2norm.1} parent=5 // pred_check_branch
      %294 = sbr.rel (%p292) target = $region36
    $region35: #{l2norm.1} parent=5 // pred_region
      %s295 = ssub.s32 %s8, 2
      // Predicated region
      $region37: #{l2norm.1} parent=35 // pred_check
        %p296 = pneg %p100
      $region38: #{l2norm.1} parent=35 // pred_check_branch
        %298 = sbr.rel (%p296) target = $region40
      $region39: #{l2norm.1} parent=35 // pred_region
        %s299 = smul.u32 2, %s20
        %p300 = scmp.lt.s32.totalorder %s19, 1
        %s301 = scalar_select %p300, %s19, 1
        %p302 = scmp.lt.s32.totalorder %s299, 1
        %s303 = scalar_select %p302, %s299, 1
        %s304 = smul.addr %s301, 2
        %s305 = sadd.s32 %s303, %s304
        %s306 = smul.addr %s305, 4
        %s307 = scalar_lea.vmem %s2, %s306
      $region40: #{l2norm.1} parent=35 // pred_fallthru
        _
    $region36: #{l2norm.1} parent=5 // pred_fallthru
      _
  $region6: #{l2norm.1} parent=0 // loop_footer
    %s12 = sadd.s32 1, %s8
  $region7: #{l2norm.1} parent=0 // loop_footer_branch
    %7 = sbr.rel target = $region3
  $region8: #{l2norm.1} parent=0 // loop_exit
    _

</llo_original>
